<compile_context>
chip_gen: v5e
topology: v5e:2x2
jax: 0.10.0
libtpu: 0.0.40
codegen_flags: <defaults>
</compile_context>

<pallas_src>
import jax
import jax.numpy as jnp
from jax import lax
from jax.experimental import pallas as pl
from jax.experimental.pallas import tpu as pltpu


_DEFAULT_VMEM_CAP = 64 * 1024 * 1024  # conservative fallback (v7x per-TC size)


def _sublane_align(dtype) -> int:
    # f32 -> 8, bf16 -> 16, int8/fp8 -> 32 (sub-32-bit dtypes pack along sublanes).
    return 8 * max(1, 4 // jnp.dtype(dtype).itemsize)


def _round_up(x: int, m: int) -> int:
    return ((x + m - 1) // m) * m


def _vmem_capacity_bytes() -> int:
    try:
        cap = int(pltpu.get_tpu_info().vmem_capacity_bytes)
        if cap > 0:
            return cap
    except Exception:
        pass
    return _DEFAULT_VMEM_CAP


def _tensorcores_per_chip() -> int:
    try:
        kind = jax.devices()[0].device_kind.lower()
        if "v7" in kind or "7x" in kind:
            return 2
    except Exception:
        pass
    return 1


def _aligned_divisors(dim: int, align: int, cap: int):
    """Aligned divisors of `dim`, descending, capped at `cap`. Assumes align | dim."""
    hi = (min(dim, cap) // align) * align
    out = []
    t = hi
    while t >= align:
        if dim % t == 0:
            out.append(t)
        t -= align
    if not out:
        out = [dim]
    return out


# ---------------------------------------------------------------------------
# Kernels
# ---------------------------------------------------------------------------

def _linear_relu_kernel_fused_k(x_ref, w_ref, b_ref, o_ref):
    # x_ref: (tm, K), w_ref: (tn, K) in PyTorch (out, in) layout, b_ref: (1, tn).
    # Contract over the last dim of both operands -> x @ W^T with no transpose.
    acc = lax.dot_general(
        x_ref[...],
        w_ref[...],
        dimension_numbers=(((1,), (1,)), ((), ())),
        preferred_element_type=jnp.float32,
    )
    y = acc + b_ref[...].astype(jnp.float32)
    o_ref[...] = jnp.maximum(y, 0.0).astype(o_ref.dtype)


def _linear_relu_kernel_split_k(x_ref, w_ref, b_ref, o_ref, acc_ref):
    # grid = (N//tn, M//tm, K//tk); K is the reduction axis (last, "arbitrary").
    k = pl.program_id(2)
    part = lax.dot_general(
        x_ref[...],
        w_ref[...],
        dimension_numbers=(((1,), (1,)), ((), ())),
        preferred_element_type=jnp.float32,
    )

    @pl.when(k == 0)
    def _():
        acc_ref[...] = part  # direct write: saves a full-tile zero store + add

    @pl.when(k != 0)
    def _():
        acc_ref[...] += part

    @pl.when(k == pl.num_programs(2) - 1)
    def _():
        y = acc_ref[...] + b_ref[...].astype(jnp.float32)
        o_ref[...] = jnp.maximum(y, 0.0).astype(o_ref.dtype)


# ---------------------------------------------------------------------------
# Wrapper
# ---------------------------------------------------------------------------

def linear_relu(x, weight, bias, *, tm=None, tn=None, tk=None, compute_dtype=None):
    """relu(x @ weight.T + bias). x: (..., K), weight: (N, K), bias: (N,).

    compute_dtype (optional, e.g. jnp.bfloat16) casts the MXU operands only; the
    accumulation, bias add and ReLU stay in f32 and the output keeps x.dtype.
    """
    *lead, K = x.shape
    N, Kw = weight.shape
    if Kw != K:
        raise ValueError(f"weight K ({Kw}) != x K ({K})")
    if bias.shape != (N,):
        raise ValueError(f"bias shape {bias.shape} != ({N},)")

    out_dtype = x.dtype

    M = 1
    for d in lead:
        M *= d
    M = max(M, 1)
    x2d = x.reshape(M, K)

    cdt = jnp.dtype(compute_dtype) if compute_dtype is not None else jnp.dtype(x.dtype)
    if x2d.dtype != cdt:
        x2d = x2d.astype(cdt)
    if weight.dtype != cdt:
        weight = weight.astype(cdt)          # explicit, no silent promotion inside the dot
    b2d = bias.astype(jnp.float32).reshape(1, N)

    x_it = cdt.itemsize
    o_it = jnp.dtype(out_dtype).itemsize
    b_it = 4
    sub = _sublane_align(cdt)

    cap = _vmem_capacity_bytes()
    budget = max(int(cap * 0.75), 24 * 1024 * 1024)  # leave headroom for Mosaic scratch

    def footprint(_tm, _tn, _tk, _split):
        f = 2 * _tk * (_tm + _tn) * x_it + 2 * _tn * b_it + 2 * _tm * _tn * o_it
        if _split:
            f += _tm * _tn * 4  # f32 accumulator scratch
        return f

    # ---- M / N alignment (zero-padding keeps results exact; padded rows/cols sliced off) ----
    if tm is not None:
        if tm != M and tm % sub:
            raise ValueError(f"tm={tm} must be a multiple of {sub} (or equal M)")
        Mp = _round_up(M, tm)
    else:
        Mp = _round_up(M, sub)
    if tn is not None:
        if tn != N and tn % 128:
            raise ValueError(f"tn={tn} must be a multiple of 128 (or equal N)")
        Np = _round_up(N, tn)
    else:
        Np = _round_up(N, 128)

    # ---- K blocking: fused whenever a minimal tile pair fits the per-chip budget ----
    if tk is not None:
        if tk == K:
            split, Kp = False, K
        else:
            if tk % 128:
                raise ValueError(f"tk={tk} must be a multiple of 128 (or equal K)")
            split, Kp = True, _round_up(K, tk)
    else:
        if footprint(sub, 128, K, False) <= budget:
            split, Kp, tk = False, K, K
        else:
            split = True
            Kp = _round_up(K, 128)
            tk = next((t for t in _aligned_divisors(Kp, 128, 1024)
                       if footprint(sub, 128, t, True) <= budget), 128)

    # ---- tn: prefer the whole weight resident in VMEM (x then streams exactly once) ----
    tm_floor = tm if tm is not None else sub
    if tn is None:
        tm_probe = tm if tm is not None else _aligned_divisors(Mp, sub, 512)[0]
        if (not split) and footprint(tm_probe, Np, tk, False) <= budget:
            tn = Np
        else:
            tn = next((t for t in _aligned_divisors(Np, 128, 1024)
                       if footprint(tm_floor, t, tk, split) <= budget), 128)

    # ---- tm: largest aligned divisor <= 512 that fits ----
    auto_tm = tm is None
    if tm is None:
        tm = next((t for t in _aligned_divisors(Mp, sub, 512)
                   if footprint(t, tn, tk, split) <= budget), sub)

    # ---- v7x only: make sure both TensorCores get work for tiny shapes ----
    if auto_tm and _tensorcores_per_chip() >= 2:
        if (Mp // tm) * (Np // tn) == 1 and tm % (2 * sub) == 0:
            tm //= 2

    assert Mp % tm == 0 and Np % tn == 0 and Kp % tk == 0, (Mp, Np, Kp, tm, tn, tk)
    Mb, Nb, Kb = Mp // tm, Np // tn, Kp // tk

    # ---- pad operands (zeros contribute nothing to the dot; bias pads to zero) ----
    if Mp != M or Kp != K:
        x2d = jnp.pad(x2d, ((0, Mp - M), (0, Kp - K)))
    if Np != N or Kp != K:
        weight = jnp.pad(weight, ((0, Np - N), (0, Kp - K)))
    if Np != N:
        b2d = jnp.pad(b2d, ((0, 0), (0, Np - N)))

    est_vmem = footprint(tm, tn, tk, split)
    vmem_limit = min(int(cap * 0.85),
                     max(int(est_vmem * 1.3), 32 * 1024 * 1024, est_vmem + (2 << 20)))

    cost = pl.CostEstimate(
        flops=2 * M * N * K,
        transcendentals=0,
        bytes_accessed=M * K * x_it + N * K * x_it + N * b_it + M * N * o_it,
    )

    if not split:
        # Keep resident whichever operand would otherwise be re-streamed more.
        x_bytes = Mp * Kp * x_it
        w_bytes = Np * Kp * x_it
        weight_stationary = x_bytes * (Nb - 1) <= w_bytes * (Mb - 1)
        if weight_stationary:
            grid = (Nb, Mb)  # weight block constant across inner i -> fetched once per j
            in_specs = [
                pl.BlockSpec((tm, Kp), lambda j, i: (i, 0)),
                pl.BlockSpec((tn, Kp), lambda j, i: (j, 0)),
                pl.BlockSpec((1, tn), lambda j, i: (0, j)),
            ]
            out_spec = pl.BlockSpec((tm, tn), lambda j, i: (i, j))
        else:
            grid = (Mb, Nb)  # x block constant across inner j -> x fetched once
            in_specs = [
                pl.BlockSpec((tm, Kp), lambda i, j: (i, 0)),
                pl.BlockSpec((tn, Kp), lambda i, j: (j, 0)),
                pl.BlockSpec((1, tn), lambda i, j: (0, j)),
            ]
            out_spec = pl.BlockSpec((tm, tn), lambda i, j: (i, j))
        grid_spec = pltpu.PrefetchScalarGridSpec(
            num_scalar_prefetch=0, grid=grid,
            in_specs=in_specs, out_specs=out_spec)
        kernel = _linear_relu_kernel_fused_k
        dim_sem = ("parallel", "parallel")
    else:
        grid = (Nb, Mb, Kb)  # reduction axis last
        in_specs = [
            pl.BlockSpec((tm, tk), lambda j, i, k: (i, k)),
            pl.BlockSpec((tn, tk), lambda j, i, k: (j, k)),
            pl.BlockSpec((1, tn), lambda j, i, k: (0, j)),
        ]
        out_spec = pl.BlockSpec((tm, tn), lambda j, i, k: (i, j))
        grid_spec = pltpu.PrefetchScalarGridSpec(
            num_scalar_prefetch=0, grid=grid,
            in_specs=in_specs, out_specs=out_spec,
            scratch_shapes=[pltpu.VMEM((tm, tn), jnp.float32)])
        kernel = _linear_relu_kernel_split_k
        dim_sem = ("parallel", "parallel", "arbitrary")

    out = pl.pallas_call(
        kernel,
        out_shape=jax.ShapeDtypeStruct((Mp, Np), out_dtype),
        grid_spec=grid_spec,
        compiler_params=pltpu.CompilerParams(
            dimension_semantics=dim_sem,
            vmem_limit_bytes=vmem_limit,
        ),
        cost_estimate=cost,
    )(x2d, weight, b2d)

    if Mp != M or Np != N:
        out = out[:M, :N]
    return out.reshape(*lead, N)


if __name__ == "__main__":
    key = jax.random.PRNGKey(0)
    kx, kw, kb, kx2, kw2, kb2 = jax.random.split(key, 6)

    # 1) Small shapes consistent with nn.Linear: in_features=256, out_features=128,
    #    batch dims (2, 8) -> x: (2, 8, 256), output: (2, 8, 128).  Fused-K path.
    in_features, out_features = 256, 128
    x = jax.random.normal(kx, (2, 8, in_features), dtype=jnp.float32)
    weight = jax.random.normal(kw, (out_features, in_features), dtype=jnp.float32) * 0.05
    bias = jax.random.normal(kb, (out_features,), dtype=jnp.float32) * 0.1

    ref = jnp.maximum(jnp.einsum("bsk,nk->bsn", x, weight) + bias, 0.0)

    y = linear_relu(x, weight, bias)
    jax.block_until_ready(y)
    assert y.shape == ref.shape
    assert jnp.allclose(y, ref, atol=1e-4, rtol=1e-4)

    # 2) Split-K path (force tk < K) to validate the accumulator kernel as well.
    y2 = linear_relu(x, weight, bias, tk=128)
    jax.block_until_ready(y2)
    assert jnp.allclose(y2, ref, atol=1e-4, rtol=1e-4)

    # 3) Ragged shapes (M=15, N=96, K=200) exercise the zero-pad + slice path.
    xr = jax.random.normal(kx2, (3, 5, 200), dtype=jnp.float32)
    wr = jax.random.normal(kw2, (96, 200), dtype=jnp.float32) * 0.05
    br = jax.random.normal(kb2, (96,), dtype=jnp.float32) * 0.1
    ref_r = jnp.maximum(jnp.einsum("bsk,nk->bsn", xr, wr) + br, 0.0)
    yr = linear_relu(xr, wr, br)
    jax.block_until_ready(yr)
    assert yr.shape == ref_r.shape
    assert jnp.allclose(yr, ref_r, atol=1e-4, rtol=1e-4)

    print("KERNEL_OK")
</pallas_src>

<mosaic_0001>
module attributes {stable_mosaic.version = 11 : i64} {
  func.func @_linear_relu_kernel_fused_k(%arg0: i32, %arg1: i32, %arg2: memref<16x256xf32, #tpu.memory_space<vmem>>, %arg3: memref<128x256xf32, #tpu.memory_space<vmem>>, %arg4: memref<1x128xf32, #tpu.memory_space<vmem>>, %arg5: memref<16x128xf32, #tpu.memory_space<vmem>>) attributes {dimension_semantics = [#tpu.dimension_semantics<parallel>, #tpu.dimension_semantics<parallel>], iteration_bounds = array<i64: 1, 1>, scalar_prefetch = 0 : i64, scratch_operands = 0 : i64, tpu.core_type = #tpu.core_type<tc>, window_params = [{transform_indices = @transform_0, window_bounds = array<i64: 16, 256>}, {transform_indices = @transform_1, window_bounds = array<i64: 128, 256>}, {transform_indices = @transform_2, window_bounds = array<i64: 1, 128>}, {transform_indices = @transform_3, window_bounds = array<i64: 16, 128>}]} {
    %c0 = arith.constant 0 : index
    %c0_0 = arith.constant 0 : index
    %0 = vector.load %arg2[%c0, %c0_0] : memref<16x256xf32, #tpu.memory_space<vmem>>, vector<16x256xf32>
    %c0_1 = arith.constant 0 : index
    %c0_2 = arith.constant 0 : index
    %1 = vector.load %arg3[%c0_1, %c0_2] : memref<128x256xf32, #tpu.memory_space<vmem>>, vector<128x256xf32>
    %cst = arith.constant dense<0.000000e+00> : vector<16x128xf32>
    %2 = tpu.matmul %0, %1, %cst {dimension_numbers = #tpu.dot_dimension_numbers<[1], [1], [0], [0], [0, 0, 1, 0], [], []>} : vector<16x256xf32>, vector<128x256xf32>, vector<16x128xf32> -> vector<16x128xf32>
    %c0_3 = arith.constant 0 : index
    %c0_4 = arith.constant 0 : index
    %3 = vector.load %arg4[%c0_3, %c0_4] : memref<1x128xf32, #tpu.memory_space<vmem>>, vector<1x128xf32>
    %4 = vector.broadcast %3 : vector<1x128xf32> to vector<16x128xf32>
    %5 = arith.addf %2, %4 : vector<16x128xf32>
    %cst_5 = arith.constant 0.000000e+00 : f32
    %6 = vector.broadcast %cst_5 : f32 to vector<16x128xf32>
    %7 = arith.maximumf %5, %6 : vector<16x128xf32>
    %c0_6 = arith.constant 0 : index
    %c0_7 = arith.constant 0 : index
    %8 = vector.load %arg5[%c0_6, %c0_7] : memref<16x128xf32, #tpu.memory_space<vmem>>, vector<16x128xf32>
    tpu.vector_store %arg5[%c0_6, %c0_7], %7 {strides = array<i32>} : memref<16x128xf32, #tpu.memory_space<vmem>>, vector<16x128xf32>,
    return
  }
  func.func @transform_0(%arg0: i32, %arg1: i32) -> (i32, i32) {
    %c0_i32 = arith.constant 0 : i32
    %c0_i32_0 = arith.constant 0 : i32
    return %arg1, %c0_i32 : i32, i32
  }
  func.func @transform_1(%arg0: i32, %arg1: i32) -> (i32, i32) {
    %c0_i32 = arith.constant 0 : i32
    %c0_i32_0 = arith.constant 0 : i32
    return %arg0, %c0_i32 : i32, i32
  }
  func.func @transform_2(%arg0: i32, %arg1: i32) -> (i32, i32) {
    %c0_i32 = arith.constant 0 : i32
    %c0_i32_0 = arith.constant 0 : i32
    return %c0_i32, %arg0 : i32, i32
  }
  func.func @transform_3(%arg0: i32, %arg1: i32) -> (i32, i32) {
    %c0_i32 = arith.constant 0 : i32
    return %arg1, %arg0 : i32, i32
  }
}

</mosaic_0001>

<llo_original>
// kernel: tpu_custom_call.1
$region0: #{tpu_custom_call.1}
  #allocation0 [shape = 'u32[]', space=smem, size = 0x4, offset = 0x4, fixed_abs, tag = 'smem constant byte address 0x4 - core index']
  #allocation1 [shape = 'u32[72,128]{1,0:T(1,128)}', space=vmem, size = 0x9000, scoped, tag = 'internal scratch']
  %s0 = inlined_call_operand.hbm [shape: f32[16,256], index: 0, kind: input, shape index: {}]
  %s1 = inlined_call_operand.hbm [shape: f32[128,256], index: 1, kind: input, shape index: {}]
  %s2 = inlined_call_operand.vmem [shape: f32[1,128], index: 2, kind: input, shape index: {}]
  %s3 = inlined_call_operand.hbm [shape: f32[16,128], index: 3, kind: output, shape index: {}]
  %s4 = sld [smem:[#allocation0]]
  $region30: #{tpu_custom_call.1} parent=0
    _
  %s6 = ssub.s32 1, %s4
  %s7 = scalar_select 0, %s6, %s4
  $region1: #{tpu_custom_call.1} parent=0
    #allocation2 [shape = 'u8[16384]{0}', space=vmem, size = 0x4000, scoped, tag = 'input window, operand 0, single buffered']
    #allocation3 [shape = 's32[1]{0}', space=sflag, size = 0x4, scoped, tag = 'scoped memory for tpu_custom_call.1']
    #allocation4 [shape = 's32[1]{0}', space=sflag, size = 0x4, scoped, tag = 'scoped memory for tpu_custom_call.1']
    #allocation5 [shape = 'u8[131072]{0}', space=vmem, size = 0x20000, scoped, tag = 'input window, operand 1, single buffered']
    #allocation6 [shape = 's32[1]{0}', space=sflag, size = 0x4, scoped, tag = 'scoped memory for tpu_custom_call.1']
    #allocation7 [shape = 'u8[8192]{0}', space=vmem, size = 0x2000, scoped, tag = 'output window, operand 0, single buffered']
    %8 = vsyncpa [#allocation3], 0
    %9 = vsyncpa [#allocation6], 0
    %10 = vsyncpa [#allocation4], 0
    // Predicated region
    $region2: #{tpu_custom_call.1} parent=1 // pred_check
      _
    $region3: #{tpu_custom_call.1} parent=1 // pred_check_branch
      %12 = sbr.rel (0) target = $region5
    $region4: #{tpu_custom_call.1} parent=1 // pred_region
      %14 = vsyncadd [#allocation3], 0
      %s15 = sshll.u32 %s0, 4
      %s16 = int_to_ptr.hbm [resolvable:$true] %s15
      %s17 = sshll.u32 [#allocation2], 4
      %s18 = int_to_ptr.vmem [resolvable:$true] %s17
      %23 = dma.hbm_to_vmem [thread:$0]  %s16, 512, %s18, [#allocation3], 256, 256, 16
    $region5: #{tpu_custom_call.1} parent=1 // pred_fallthru
      _
    // Predicated region
    $region6: #{tpu_custom_call.1} parent=1 // pred_check
      _
    $region7: #{tpu_custom_call.1} parent=1 // pred_check_branch
      %25 = sbr.rel (0) target = $region9
    $region8: #{tpu_custom_call.1} parent=1 // pred_region
      %27 = vsyncadd [#allocation6], 0
      %s28 = sshll.u32 %s1, 4
      %s29 = int_to_ptr.hbm [resolvable:$true] %s28
      %s30 = sshll.u32 [#allocation5], 4
      %s31 = int_to_ptr.vmem [resolvable:$true] %s30
      %36 = dma.hbm_to_vmem [thread:$0]  %s29, 4096, %s31, [#allocation6], 256, 256, 16
    $region9: #{tpu_custom_call.1} parent=1 // pred_fallthru
      _
    // Predicated region
    $region10: #{tpu_custom_call.1} parent=1 // pred_check
      _
    $region11: #{tpu_custom_call.1} parent=1 // pred_check_branch
      %38 = sbr.rel (0) target = $region13
    $region12: #{tpu_custom_call.1} parent=1 // pred_region
      _
    $region13: #{tpu_custom_call.1} parent=1 // pred_fallthru
      _
    // Predicated region
    $region14: #{tpu_custom_call.1} parent=1 // pred_check
      _
    $region15: #{tpu_custom_call.1} parent=1 // pred_check_branch
      %40 = sbr.rel (0) target = $region17
    $region16: #{tpu_custom_call.1} parent=1 // pred_region
      %42 = dma.done [#allocation3], 512
    $region17: #{tpu_custom_call.1} parent=1 // pred_fallthru
      _
    // Predicated region
    $region18: #{tpu_custom_call.1} parent=1 // pred_check
      _
    $region19: #{tpu_custom_call.1} parent=1 // pred_check_branch
      %44 = sbr.rel (0) target = $region21
    $region20: #{tpu_custom_call.1} parent=1 // pred_region
      %46 = dma.done [#allocation6], 4096
    $region21: #{tpu_custom_call.1} parent=1 // pred_fallthru
      _
    %v47 = vld [vmem:[#allocation2] sm:$0xff]
    %v48 = vld [vmem:[#allocation2 + $0x8] sm:$0xff]
    %v49 = vld [vmem:[#allocation2 + $0x10] sm:$0xff]
    %v50 = vld [vmem:[#allocation2 + $0x18] sm:$0xff]
    %v51 = vld [vmem:[#allocation5] sm:$0xff]
    %v52 = vld [vmem:[#allocation5 + $0x8] sm:$0xff]
    %v53 = vld [vmem:[#allocation5 + $0x10] sm:$0xff]
    %v54 = vld [vmem:[#allocation5 + $0x18] sm:$0xff]
    %v55 = vld [vmem:[#allocation5 + $0x20] sm:$0xff]
    %v56 = vld [vmem:[#allocation5 + $0x28] sm:$0xff]
    %v57 = vld [vmem:[#allocation5 + $0x30] sm:$0xff]
    %v58 = vld [vmem:[#allocation5 + $0x38] sm:$0xff]
    %v59 = vld [vmem:[#allocation5 + $0x40] sm:$0xff]
    %v60 = vld [vmem:[#allocation5 + $0x48] sm:$0xff]
    %v61 = vld [vmem:[#allocation5 + $0x50] sm:$0xff]
    %v62 = vld [vmem:[#allocation5 + $0x58] sm:$0xff]
    %v63 = vld [vmem:[#allocation5 + $0x60] sm:$0xff]
    %v64 = vld [vmem:[#allocation5 + $0x68] sm:$0xff]
    %v65 = vld [vmem:[#allocation5 + $0x70] sm:$0xff]
    %v66 = vld [vmem:[#allocation5 + $0x78] sm:$0xff]
    %v67 = vld [vmem:[#allocation5 + $0x80] sm:$0xff]
    %v68 = vld [vmem:[#allocation5 + $0x88] sm:$0xff]
    %v69 = vld [vmem:[#allocation5 + $0x90] sm:$0xff]
    %v70 = vld [vmem:[#allocation5 + $0x98] sm:$0xff]
    %v71 = vld [vmem:[#allocation5 + $0xa0] sm:$0xff]
    %v72 = vld [vmem:[#allocation5 + $0xa8] sm:$0xff]
    %v73 = vld [vmem:[#allocation5 + $0xb0] sm:$0xff]
    %v74 = vld [vmem:[#allocation5 + $0xb8] sm:$0xff]
    %v75 = vld [vmem:[#allocation5 + $0xc0] sm:$0xff]
    %v76 = vld [vmem:[#allocation5 + $0xc8] sm:$0xff]
    %v77 = vld [vmem:[#allocation5 + $0xd0] sm:$0xff]
    %v78 = vld [vmem:[#allocation5 + $0xd8] sm:$0xff]
    %v79 = vld [vmem:[#allocation5 + $0xe0] sm:$0xff]
    %v80 = vld [vmem:[#allocation5 + $0xe8] sm:$0xff]
    %v81 = vld [vmem:[#allocation5 + $0xf0] sm:$0xff]
    %v82 = vld [vmem:[#allocation5 + $0xf8] sm:$0xff]
    %v83 = vld [vmem:[%s2] sm:$0x1]
    %v85 = vperm.slane %v83, 0
    %87 = vmatpush.xpose.msra.mxu0 %v81
    %88 = vmatpush.xpose.msra.mxu0 %v79
    %89 = vmatpush.xpose.msra.mxu0 %v77
    %90 = vmatpush.xpose.msra.mxu0 %v75
    %91 = vmatpush.xpose.msra.mxu0 %v73
    %92 = vmatpush.xpose.msra.mxu0 %v71
    %93 = vmatpush.xpose.msra.mxu0 %v69
    %94 = vmatpush.xpose.msra.mxu0 %v67
    %95 = vmatpush.xpose.msra.mxu0 %v65
    %96 = vmatpush.xpose.msra.mxu0 %v63
    %97 = vmatpush.xpose.msra.mxu0 %v61
    %98 = vmatpush.xpose.msra.mxu0 %v59
    %99 = vmatpush.xpose.msra.mxu0 %v57
    %100 = vmatpush.xpose.msra.mxu0 %v55
    %101 = vmatpush.xpose.msra.mxu0 %v53
    %102 = vmatpush.xpose.msra.mxu0 %v51
    %103 = vmatmul.f32.gmra.mxu0 %v47
    %v104 = vpop.f32.mrf.mxu0
    %v105 = vadd.f32 %v85, %v104
    %106 = vmatmul.f32.gmra.mxu0 %v49
    %v107 = vpop.f32.mrf.mxu0
    %v108 = vadd.f32 %v85, %v107
    %109 = vdwg.mxu0
    %110 = vmatpush.xpose.msra.mxu0 %v82
    %111 = vmatpush.xpose.msra.mxu0 %v80
    %112 = vmatpush.xpose.msra.mxu0 %v78
    %113 = vmatpush.xpose.msra.mxu0 %v76
    %114 = vmatpush.xpose.msra.mxu0 %v74
    %115 = vmatpush.xpose.msra.mxu0 %v72
    %116 = vmatpush.xpose.msra.mxu0 %v70
    %117 = vmatpush.xpose.msra.mxu0 %v68
    %118 = vmatpush.xpose.msra.mxu0 %v66
    %119 = vmatpush.xpose.msra.mxu0 %v64
    %120 = vmatpush.xpose.msra.mxu0 %v62
    %121 = vmatpush.xpose.msra.mxu0 %v60
    %122 = vmatpush.xpose.msra.mxu0 %v58
    %123 = vmatpush.xpose.msra.mxu0 %v56
    %124 = vmatpush.xpose.msra.mxu0 %v54
    %125 = vmatpush.xpose.msra.mxu0 %v52
    %126 = vmatmul.f32.gmra.mxu0 %v48
    %v127 = vpop.f32.mrf.mxu0
    %v128 = vadd.f32 %v105, %v127
    %129 = vmatmul.f32.gmra.mxu0 %v50
    %v130 = vpop.f32.mrf.mxu0
    %v131 = vadd.f32 %v108, %v130
    %132 = vdwg.mxu0
    %v133 = vmax.f32 %v128, 0.0
    %v134 = vmax.f32 %v131, 0.0
    %135 = vst [vmem:[#allocation7] sm:$0xff] %v133
    %136 = vst [vmem:[#allocation7 + $0x8] sm:$0xff] %v134
    // Predicated region
    $region22: #{tpu_custom_call.1} parent=1 // pred_check
      _
    $region23: #{tpu_custom_call.1} parent=1 // pred_check_branch
      %138 = sbr.rel (0) target = $region25
    $region24: #{tpu_custom_call.1} parent=1 // pred_region
      %140 = vsyncadd [#allocation4], 0
      %s141 = sshll.u32 [#allocation7], 4
      %s142 = int_to_ptr.vmem [resolvable:$true] %s141
      %s143 = sshll.u32 %s3, 4
      %s144 = int_to_ptr.hbm [resolvable:$true] %s143
      %149 = dma.vmem_to_hbm [thread:$0]  %s142, 256, %s144, [#allocation4], 128, 128, 8
    $region25: #{tpu_custom_call.1} parent=1 // pred_fallthru
      _
    // Predicated region
    $region26: #{tpu_custom_call.1} parent=1 // pred_check
      _
    $region27: #{tpu_custom_call.1} parent=1 // pred_check_branch
      %151 = sbr.rel (0) target = $region29
    $region28: #{tpu_custom_call.1} parent=1 // pred_region
      %153 = dma.done [#allocation4], 256
    $region29: #{tpu_custom_call.1} parent=1 // pred_fallthru
      _
    %154 = vsyncpa [#allocation3], 1
    %155 = vsyncpa [#allocation6], 1
    %156 = vsyncpa [#allocation4], 1

</llo_original>
